<compile_context>
chip_gen: v5e
topology: v5e:2x2
jax: 0.10.0
libtpu: 0.0.40
codegen_flags: <defaults>
</compile_context>

<pallas_src>
import functools

import jax
import jax.numpy as jnp
from jax.experimental import pallas as pl
from jax.experimental.pallas import tpu as pltpu


def _dnd_hbm_copy_kernel(x_hbm, o_hbm, sems, *, starts, chunk, rows):
    """Chunked HBM->HBM DMA copy (identity forward of `input * ones_like`)."""
    copies = []
    for i, s in enumerate(starts):
        size = min(chunk, rows - s)  # static (trace-time) chunking
        cp = pltpu.make_async_copy(
            x_hbm.at[pl.ds(s, size)],
            o_hbm.at[pl.ds(s, size)],
            sems.at[i],
        )
        cp.start()
        copies.append(cp)
    for cp in copies:
        cp.wait()


def dnd_input_gate(x, *, materialize=False, alias_input=False,
                   min_kernel_bytes=256 * 1024, max_dma_in_flight=4):
    """Pallas implementation of DND.forward's tensor compute.

    `input * torch.ones_like(input)` is the identity in the forward pass.

    Args:
      x: (..., F) array (DND uses (batch, seqlen, feature)).
      materialize: if False (default), return `x` directly — the recommended
        zero-HBM-traffic path.  If True, return a freshly materialized copy
        produced by chunked HBM->HBM DMA.
      alias_input: kept for API compatibility; aliasing cannot save HBM
        traffic for an identity op, so this path also just returns `x`.
      min_kernel_bytes: below this size the kernel is pure launch overhead,
        so return `x` instead.
      max_dma_in_flight: number of concurrent DMA chunks (2-4 recommended).

    Returns:
      Array with the same shape/dtype/values as x (the tensor handed to the
      regressor in the PyTorch module).
    """
    if not materialize or alias_input:
        return x  # identity; no kernel, no HBM traffic.

    nbytes = x.size * jnp.dtype(x.dtype).itemsize
    if x.size == 0 or nbytes < min_kernel_bytes:
        return x  # tiny-tensor fast path: kernel launch would dominate.

    orig_shape = x.shape
    feat = orig_shape[-1] if x.ndim >= 1 else 1
    rows = x.size // feat
    x2d = x.reshape(rows, feat)

    # Static chunking: <= max_dma_in_flight DMAs, chunk starts 8-row aligned.
    n = max(1, min(int(max_dma_in_flight), rows))
    chunk = -(-rows // n)                    # ceil(rows / n)
    chunk = ((chunk + 7) // 8) * 8           # 8-row granularity (last ragged)
    starts = tuple(range(0, rows, chunk))

    kernel = functools.partial(
        _dnd_hbm_copy_kernel, starts=starts, chunk=chunk, rows=rows)

    out2d = pl.pallas_call(
        kernel,
        out_shape=jax.ShapeDtypeStruct((rows, feat), x.dtype),
        # Raw HBM refs on both sides: no auto-DMA, no VMEM staging.
        in_specs=[pl.BlockSpec(memory_space=pl.ANY)],
        out_specs=pl.BlockSpec(memory_space=pl.ANY),
        scratch_shapes=[pltpu.SemaphoreType.DMA((len(starts),))],
    )(x2d)

    return out2d.reshape(orig_shape)


if __name__ == "__main__":
    # Small deterministic example consistent with DND's (batch, seqlen, feat)
    # input convention.
    B, T, FEAT = 2, 8, 128
    key = jax.random.PRNGKey(0)
    x = jax.random.normal(key, (B, T, FEAT), dtype=jnp.float32)

    # Primary path used by DND.forward: the op is the identity, so no kernel
    # (and no HBM traffic).  The aliased path is identical.
    y_fast = dnd_input_gate(x)
    assert y_fast is x
    y_alias = dnd_input_gate(x, materialize=True, alias_input=True)
    assert y_alias is x

    # Materialized-copy path, forced past the small-input fast path so the
    # Pallas HBM->HBM DMA kernel actually executes once.
    y = dnd_input_gate(x, materialize=True, min_kernel_bytes=0)
    y = jax.block_until_ready(y)
    assert y.shape == (B, T, FEAT)
    assert y.dtype == x.dtype
    assert jnp.array_equal(y, x), "mismatch vs reference"

    # Ragged shape (rows/features not multiples of 8/128) + narrow dtype.
    x2 = jax.random.normal(jax.random.PRNGKey(0), (3, 7, 96),
                           dtype=jnp.bfloat16)
    y2 = jax.block_until_ready(
        dnd_input_gate(x2, materialize=True, min_kernel_bytes=0))
    assert y2.shape == x2.shape and y2.dtype == x2.dtype
    assert jnp.array_equal(y2, x2), "mismatch vs reference (ragged)"

    print("KERNEL_OK")
</pallas_src>

<mosaic_0001>
module attributes {stable_mosaic.version = 11 : i64} {
  func.func @_dnd_hbm_copy_kernel(%arg0: memref<16x128xf32, #tpu.memory_space<any>>, %arg1: memref<16x128xf32, #tpu.memory_space<any>>, %arg2: memref<2x!tpu.dma_semaphore, #tpu.memory_space<semaphore_mem>>) attributes {dimension_semantics = [], scalar_prefetch = 0 : i64, scratch_operands = 1 : i64, tpu.core_type = #tpu.core_type<tc>} {
    %c0_i32 = arith.constant 0 : i32
    %c0_i32_0 = arith.constant 0 : i32
    %c0_i32_1 = arith.constant 0 : i32
    %0 = tpu.memref_slice %arg0[%c0_i32_0, %c0_i32_1] : memref<16x128xf32, #tpu.memory_space<any>> -> memref<8x128xf32, #tpu.memory_space<any>>
    %c0_i32_2 = arith.constant 0 : i32
    %c0_i32_3 = arith.constant 0 : i32
    %1 = tpu.memref_slice %arg1[%c0_i32_2, %c0_i32_3] : memref<16x128xf32, #tpu.memory_space<any>> -> memref<8x128xf32, #tpu.memory_space<any>>
    %2 = tpu.memref_slice %arg2[%c0_i32] : memref<2x!tpu.dma_semaphore, #tpu.memory_space<semaphore_mem>> -> memref<1x!tpu.dma_semaphore, #tpu.memory_space<semaphore_mem>>
    %3 = tpu.memref_squeeze %2 : memref<1x!tpu.dma_semaphore, #tpu.memory_space<semaphore_mem>> -> memref<!tpu.dma_semaphore, #tpu.memory_space<semaphore_mem>>
    tpu.enqueue_dma source(%0 : memref<8x128xf32, #tpu.memory_space<any>>) target(%1 : memref<8x128xf32, #tpu.memory_space<any>>) target_semaphore(%3 : memref<!tpu.dma_semaphore, #tpu.memory_space<semaphore_mem>>)
    %c1_i32 = arith.constant 1 : i32
    %c8_i32 = arith.constant 8 : i32
    %c0_i32_4 = arith.constant 0 : i32
    %4 = tpu.memref_slice %arg0[%c8_i32, %c0_i32_4] : memref<16x128xf32, #tpu.memory_space<any>> -> memref<8x128xf32, #tpu.memory_space<any>>
    %c8_i32_5 = arith.constant 8 : i32
    %c0_i32_6 = arith.constant 0 : i32
    %5 = tpu.memref_slice %arg1[%c8_i32_5, %c0_i32_6] : memref<16x128xf32, #tpu.memory_space<any>> -> memref<8x128xf32, #tpu.memory_space<any>>
    %6 = tpu.memref_slice %arg2[%c1_i32] : memref<2x!tpu.dma_semaphore, #tpu.memory_space<semaphore_mem>> -> memref<1x!tpu.dma_semaphore, #tpu.memory_space<semaphore_mem>>
    %7 = tpu.memref_squeeze %6 : memref<1x!tpu.dma_semaphore, #tpu.memory_space<semaphore_mem>> -> memref<!tpu.dma_semaphore, #tpu.memory_space<semaphore_mem>>
    tpu.enqueue_dma source(%4 : memref<8x128xf32, #tpu.memory_space<any>>) target(%5 : memref<8x128xf32, #tpu.memory_space<any>>) target_semaphore(%7 : memref<!tpu.dma_semaphore, #tpu.memory_space<semaphore_mem>>)
    %c0_i32_7 = arith.constant 0 : i32
    %c0_i32_8 = arith.constant 0 : i32
    %c0_i32_9 = arith.constant 0 : i32
    %8 = tpu.memref_slice %arg0[%c0_i32_8, %c0_i32_9] : memref<16x128xf32, #tpu.memory_space<any>> -> memref<8x128xf32, #tpu.memory_space<any>>
    %c0_i32_10 = arith.constant 0 : i32
    %c0_i32_11 = arith.constant 0 : i32
    %9 = tpu.memref_slice %arg1[%c0_i32_10, %c0_i32_11] : memref<16x128xf32, #tpu.memory_space<any>> -> memref<8x128xf32, #tpu.memory_space<any>>
    %10 = tpu.memref_slice %arg2[%c0_i32_7] : memref<2x!tpu.dma_semaphore, #tpu.memory_space<semaphore_mem>> -> memref<1x!tpu.dma_semaphore, #tpu.memory_space<semaphore_mem>>
    %11 = tpu.memref_squeeze %10 : memref<1x!tpu.dma_semaphore, #tpu.memory_space<semaphore_mem>> -> memref<!tpu.dma_semaphore, #tpu.memory_space<semaphore_mem>>
    tpu.wait_dma2 semaphore(%11 : memref<!tpu.dma_semaphore, #tpu.memory_space<semaphore_mem>>) src(%8 : memref<8x128xf32, #tpu.memory_space<any>>) dst(%9 : memref<8x128xf32, #tpu.memory_space<any>>)
    %c1_i32_12 = arith.constant 1 : i32
    %c8_i32_13 = arith.constant 8 : i32
    %c0_i32_14 = arith.constant 0 : i32
    %12 = tpu.memref_slice %arg0[%c8_i32_13, %c0_i32_14] : memref<16x128xf32, #tpu.memory_space<any>> -> memref<8x128xf32, #tpu.memory_space<any>>
    %c8_i32_15 = arith.constant 8 : i32
    %c0_i32_16 = arith.constant 0 : i32
    %13 = tpu.memref_slice %arg1[%c8_i32_15, %c0_i32_16] : memref<16x128xf32, #tpu.memory_space<any>> -> memref<8x128xf32, #tpu.memory_space<any>>
    %14 = tpu.memref_slice %arg2[%c1_i32_12] : memref<2x!tpu.dma_semaphore, #tpu.memory_space<semaphore_mem>> -> memref<1x!tpu.dma_semaphore, #tpu.memory_space<semaphore_mem>>
    %15 = tpu.memref_squeeze %14 : memref<1x!tpu.dma_semaphore, #tpu.memory_space<semaphore_mem>> -> memref<!tpu.dma_semaphore, #tpu.memory_space<semaphore_mem>>
    tpu.wait_dma2 semaphore(%15 : memref<!tpu.dma_semaphore, #tpu.memory_space<semaphore_mem>>) src(%12 : memref<8x128xf32, #tpu.memory_space<any>>) dst(%13 : memref<8x128xf32, #tpu.memory_space<any>>)
    return
  }
}

</mosaic_0001>

<llo_original>
// kernel: tpu_custom_call.1
$region0: #{tpu_custom_call.1}
  #allocation0 [shape = 'u32[]', space=smem, size = 0x4, offset = 0x4, fixed_abs, tag = 'smem constant byte address 0x4 - core index']
  #allocation1 [shape = 'u32[72,128]{1,0:T(1,128)}', space=vmem, size = 0x9000, scoped, tag = 'internal scratch']
  #allocation2 [shape = 's32[2]{0}', space=sflag, size = 0x8, scoped, tag = 'scratch operand']
  #allocation3 [shape = 's32[]', space=sflag, size = 0x4, offset = 0, fixed_abs, tag = 'sflag constant byte address 0x0 - dummy sync flag']
  #allocation4 [shape = 'u32[0]{0}', space=smem, size = 0, offset = 0, fixed_abs, tag = 'smem constant byte address 0x0 - null']
  #allocation5 [shape = 's32[]', space=sflag, size = 0x4, offset = 0, fixed_abs, tag = 'sflag constant byte address 0x0 - dummy sync flag']
  #allocation6 [shape = 'u32[0]{0}', space=smem, size = 0, offset = 0, fixed_abs, tag = 'smem constant byte address 0x0 - null']
  %s0 = inlined_call_operand.hbm [shape: f32[16,128], index: 0, kind: input, shape index: {}]
  %s1 = inlined_call_operand.hbm [shape: f32[16,128], index: 1, kind: output, shape index: {}]
  %s2 = sld [smem:[#allocation0]]
  $region2: #{tpu_custom_call.1} parent=0
    _
  %s4 = ssub.s32 1, %s2
  %s5 = scalar_select 0, %s4, %s2
  %s7 = sshll.u32 1, 14
  %s8 = sxor.u32 4294967295, %s7
  %s10 = sshll.u32 %s0, 4
  %s11 = int_to_ptr.hbm [resolvable:$true] %s10
  %s12 = sshll.u32 %s1, 4
  %s13 = int_to_ptr.hbm [resolvable:$true] %s12
  %16 = dma.general %s11, 128, %s13, [#allocation2], [#allocation3], [#allocation4], 0, 0
  %s17 = scalar_lea.hbm %s0, 8
  %s18 = scalar_lea.hbm %s1, 8
  %s19 = scalar_lea.sflag [#allocation2], 1
  %s21 = sshll.u32 1, 14
  %s22 = sxor.u32 4294967295, %s21
  %s24 = sshll.u32 %s17, 4
  %s25 = int_to_ptr.hbm [resolvable:$true] %s24
  %s26 = sshll.u32 %s18, 4
  %s27 = int_to_ptr.hbm [resolvable:$true] %s26
  %30 = dma.general %s25, 128, %s27, %s19, [#allocation5], [#allocation6], 0, 0
  %s31 = smul.u32 8, 1
  %s32 = sshll.u32 %s31, 4
  %33 = dma.done [#allocation2], %s32
  %s34 = sshll.u32 %s31, 4
  %35 = dma.done %s19, %s34
  %36 = vsyncmov [#allocation2]
  %s37 = vpop.sfrf %36
  %p38 = scmp.eq.s32.totalorder %s37, 0
  %p39 = pneg %p38
  %41 = shalt.err (%p39)
  %s42 = scalar_lea.sflag [#allocation2], 1
  %43 = vsyncmov %s42
  %s44 = vpop.sfrf %43
  %p45 = scmp.eq.s32.totalorder %s44, 0
  %p46 = pneg %p45
  %48 = shalt.err (%p46)

</llo_original>
